<compile_context>
chip_gen: v6e
topology: v6e:2x2x1
jax: 0.10.0
libtpu: 0.0.40
codegen_flags: <defaults>
</compile_context>

<pallas_src>
import jax
import jax.numpy as jnp
import numpy as np
from jax.experimental import pallas as pl
from jax.experimental.pallas import tpu as pltpu


# ----------------------------------------------------------------------------- #
# Kernel A: grouped-sparsemax support + per-tile partial group sums.
#   Comparison matrix is [f (sublane, all edges), e (lane, this tile)];
#   the per-group sums put the group id on the sublane axis (O(N_g * TE)).
# ----------------------------------------------------------------------------- #
def _support_group_kernel(rowc_ref, wcol_ref, rowr_ref, wrow_ref, kg_ref, sg_ref):
    row_c = rowc_ref[...]                      # (E_pad, 1) i32  row[f]  (pad = -1)
    w_col = wcol_ref[...]                      # (E_pad, 1) f32  w[f]
    row_r = rowr_ref[...]                      # (1, TE)    i32  row[e]  (pad = -1)
    w_row = wrow_ref[...]                      # (1, TE)    f32  w[e]
    n_g = kg_ref.shape[0]                      # group count, padded to mult. of 8
    te = row_r.shape[1]

    # support condition (sort-free sparsemax):
    #   e in support  <=>  sum_{f in grp(e), w_f >= w_e} (w_f - w_e) < 1
    mask = jnp.logical_and(row_c == row_r, w_col >= w_row)          # (E_pad, TE)
    acc = jnp.sum(jnp.where(mask, w_col - w_row, 0.0),
                  axis=0, keepdims=True)                            # (1, TE)
    supp = jnp.where(acc < 1.0, 1.0, 0.0)                           # (1, TE)

    # per-group partial sums for this tile (group id on sublanes, O(N_g*TE))
    gid = jax.lax.broadcasted_iota(jnp.int32, (n_g, te), 0)
    gmask = gid == row_r                                            # (N_g, TE)
    kg_ref[...] = jnp.sum(jnp.where(gmask, supp, 0.0),
                          axis=1, keepdims=True)                    # (N_g, 1)
    sg_ref[...] = jnp.sum(jnp.where(gmask, supp * w_row, 0.0),
                          axis=1, keepdims=True)                    # (N_g, 1)


# ----------------------------------------------------------------------------- #
# Kernel B: gather tau[row_e] (group id on sublanes) and write the lane-dense
# output attr_e = max(w_e - tau[row_e], 0).   (supp multiply is redundant:
# non-support elements satisfy w_e <= tau by construction.)
# ----------------------------------------------------------------------------- #
def _attr_kernel(tau_ref, rowr_ref, wrow_ref, out_ref):
    tau = tau_ref[...]                         # (N_g, 1) f32 per-group threshold
    row_r = rowr_ref[...]                      # (1, TE)  i32
    w_row = wrow_ref[...]                      # (1, TE)  f32
    n_g = tau.shape[0]
    te = row_r.shape[1]

    gid = jax.lax.broadcasted_iota(jnp.int32, (n_g, te), 0)
    tau_e = jnp.sum(jnp.where(gid == row_r, tau, 0.0),
                    axis=0, keepdims=True)                          # (1, TE)
    out_ref[...] = jnp.maximum(w_row - tau_e, 0.0)


def _pick_tile(e_pad: int) -> int:
    """Prefer >=2 tiles (both v7x TensorCores busy) and keep each (E_pad, TE)
    f32 intermediate under ~8 MiB so stages fit scoped VMEM on v5e/v7x."""
    budget_elems = (8 * 1024 * 1024) // 4
    for te in (512, 256, 128):
        if e_pad % te == 0 and e_pad // te >= 2 and e_pad * te <= budget_elems:
            return te
    for te in (512, 256, 128):
        if e_pad % te == 0 and e_pad * te <= budget_elems:
            return te
    return 128


def edge_attention_pallas(x, edge_index, att, negative_slope=0.2):
    """Per-edge grouped-sparsemax attention, shape (E,)."""
    N, C = x.shape
    E = edge_index.shape[1]
    E_pad = ((E + 127) // 128) * 128          # lane-pad the edge axis
    TE = _pick_tile(E_pad)
    n_tiles = E_pad // TE
    N_g = ((N + 7) // 8) * 8                  # group axis padded to sublane mult.

    x_f = x.astype(jnp.float32)
    att_f = att.astype(jnp.float32).reshape(-1)
    row = edge_index[0].astype(jnp.int32)
    col = edge_index[1].astype(jnp.int32)

    # --- edge logits in plain XLA (trivial O(N*C) dots + gather) -------------
    a = x_f @ att_f[:C]                                     # (N,)
    b = x_f @ att_f[C:]                                     # (N,)
    w = a[row] + b[col]                                     # (E,)
    w = jnp.where(w > 0, w, negative_slope * w)             # leaky relu

    # Padded edges get row = -1: they never match a real group, never
    # contaminate real support comparisons, and never enter kg/sg.
    pad = E_pad - E
    row_p = jnp.pad(row, (0, pad), constant_values=-1)
    w_p = jnp.pad(w, (0, pad))
    row_r = row_p.reshape(1, E_pad)           # lane-oriented
    w_row = w_p.reshape(1, E_pad)
    row_c = row_p.reshape(E_pad, 1)           # sublane-oriented (bitwise reshape)
    w_col = w_p.reshape(E_pad, 1)

    heavy_params = pltpu.CompilerParams(
        dimension_semantics=("parallel",),
        vmem_limit_bytes=48 * 1024 * 1024,
    )

    # --- Kernel A: support + per-tile partial group sums ---------------------
    kg_parts, sg_parts = pl.pallas_call(
        _support_group_kernel,
        out_shape=(jax.ShapeDtypeStruct((n_tiles * N_g, 1), jnp.float32),
                   jax.ShapeDtypeStruct((n_tiles * N_g, 1), jnp.float32)),
        grid=(n_tiles,),
        in_specs=[
            pl.BlockSpec((E_pad, 1), lambda i: (0, 0)),     # row[f]  (resident)
            pl.BlockSpec((E_pad, 1), lambda i: (0, 0)),     # w[f]    (resident)
            pl.BlockSpec((1, TE), lambda i: (0, i)),        # row[e]  tile
            pl.BlockSpec((1, TE), lambda i: (0, i)),        # w[e]    tile
        ],
        out_specs=(pl.BlockSpec((N_g, 1), lambda i: (i, 0)),
                   pl.BlockSpec((N_g, 1), lambda i: (i, 0))),
        compiler_params=heavy_params,
    )(row_c, w_col, row_r, w_row)

    # --- tau finalization: tiny per-group reduction, plain XLA ---------------
    kg = kg_parts.reshape(n_tiles, N_g).sum(axis=0)         # (N_g,)
    sg = sg_parts.reshape(n_tiles, N_g).sum(axis=0)
    tau = (sg - 1.0) / jnp.maximum(kg, 1.0)                 # empty groups unused
    tau_col = tau.reshape(N_g, 1)

    # --- Kernel B: lane-dense output attr = max(w - tau[row], 0) -------------
    attr = pl.pallas_call(
        _attr_kernel,
        out_shape=jax.ShapeDtypeStruct((1, E_pad), jnp.float32),
        grid=(n_tiles,),
        in_specs=[
            pl.BlockSpec((N_g, 1), lambda i: (0, 0)),       # tau (resident)
            pl.BlockSpec((1, TE), lambda i: (0, i)),        # row[e] tile
            pl.BlockSpec((1, TE), lambda i: (0, i)),        # w[e]   tile
        ],
        out_specs=pl.BlockSpec((1, TE), lambda i: (0, i)),
        compiler_params=pltpu.CompilerParams(dimension_semantics=("parallel",)),
    )(tau_col, row_r, w_row)

    return attr[0, :E]


def edgelayer_forward(x, edge_index, att, negative_slope=0.2):
    """Pallas version of Edgelayer.forward (sparse=True path)."""
    E = edge_index.shape[1]
    attr = edge_attention_pallas(x, edge_index, att, negative_slope)
    mask = attr != 0
    num_valid = jnp.sum(mask.astype(jnp.int32))
    # TODO(synk): torch returns dynamically-sized (new_edge_index, new_edge_attr);
    # JAX needs static shapes, so return E-padded gathers plus the valid count
    # (downstream consumers must honor num_valid).
    ind = jnp.nonzero(mask, size=E, fill_value=0)[0]
    new_edge_index = edge_index[:, ind]
    new_edge_attr = attr[ind]
    return new_edge_index, new_edge_attr, num_valid


def _reference_attr(x, edge_index, att, slope):
    """Pure numpy reference: leaky-relu logits + grouped sparsemax (sorted form)."""
    x = np.asarray(x, np.float32)
    ei = np.asarray(edge_index)
    att = np.asarray(att, np.float32)
    row, col = ei[0], ei[1]
    w = (np.concatenate([x[row], x[col]], axis=1) * att).sum(-1)
    w = np.where(w > 0, w, slope * w).astype(np.float32)
    out = np.zeros_like(w)
    for n in np.unique(row):
        idx = np.where(row == n)[0]
        z = w[idx]
        zs = np.sort(z)[::-1]
        css = np.cumsum(zs)
        ks = np.arange(1, len(z) + 1, dtype=np.float32)
        cond = 1.0 + ks * zs > css
        k = int(ks[cond].max())
        tau = (css[k - 1] - 1.0) / k
        out[idx] = np.maximum(z - tau, 0.0)
    return out


if __name__ == "__main__":
    # small shapes consistent with the module: N nodes, in_channels=C, E edges
    # E = 300 exercises edge-axis padding (-> 384) and the multi-tile grid.
    N, C, E = 16, 32, 300
    slope = 0.2

    key = jax.random.PRNGKey(0)
    kx, ke, ka = jax.random.split(key, 3)
    x = jax.random.normal(kx, (N, C), dtype=jnp.float32)
    edge_index = jax.random.randint(ke, (2, E), 0, N, dtype=jnp.int32)

    # deterministic xavier_uniform init of att (1, 2C): fan_in=2C, fan_out=1
    bound = float(np.sqrt(6.0 / (2 * C + 1)))
    att = jax.random.uniform(ka, (1, 2 * C), minval=-bound, maxval=bound,
                             dtype=jnp.float32)

    new_edge_index, new_edge_attr, num_valid = edgelayer_forward(
        x, edge_index, att, negative_slope=slope)
    jax.block_until_ready((new_edge_index, new_edge_attr, num_valid))

    # correctness check against a pure-numpy reference of the attention values
    attr_kernel = np.asarray(edge_attention_pallas(x, edge_index, att, slope))
    attr_ref = _reference_attr(x, edge_index, att, slope)
    assert np.allclose(attr_kernel, attr_ref, atol=1e-4, rtol=1e-4), \
        f"max err {np.abs(attr_kernel - attr_ref).max()}"

    print("KERNEL_OK")
</pallas_src>

<mosaic_0001>
module attributes {stable_mosaic.version = 11 : i64} {
  func.func @_support_group_kernel(%arg0: i32, %arg1: memref<384x1xi32, #tpu.memory_space<vmem>>, %arg2: memref<384x1xf32, #tpu.memory_space<vmem>>, %arg3: memref<1x128xi32, #tpu.memory_space<vmem>>, %arg4: memref<1x128xf32, #tpu.memory_space<vmem>>, %arg5: memref<16x1xf32, #tpu.memory_space<vmem>>, %arg6: memref<16x1xf32, #tpu.memory_space<vmem>>) attributes {dimension_semantics = [#tpu.dimension_semantics<parallel>], iteration_bounds = array<i64: 3>, scalar_prefetch = 0 : i64, scratch_operands = 0 : i64, tpu.core_type = #tpu.core_type<tc>, window_params = [{pipeline_mode = #tpu.pipeline_mode<synchronous>, transform_indices = @transform_0, window_bounds = array<i64: 384, 1>}, {pipeline_mode = #tpu.pipeline_mode<synchronous>, transform_indices = @transform_1, window_bounds = array<i64: 384, 1>}, {transform_indices = @transform_2, window_bounds = array<i64: 1, 128>}, {transform_indices = @transform_3, window_bounds = array<i64: 1, 128>}, {transform_indices = @transform_4, window_bounds = array<i64: 16, 1>}, {transform_indices = @transform_5, window_bounds = array<i64: 16, 1>}]} {
    %c0 = arith.constant 0 : index
    %c0_0 = arith.constant 0 : index
    %0 = vector.load %arg1[%c0, %c0_0] : memref<384x1xi32, #tpu.memory_space<vmem>>, vector<384x1xi32>
    %c0_1 = arith.constant 0 : index
    %c0_2 = arith.constant 0 : index
    %1 = vector.load %arg2[%c0_1, %c0_2] : memref<384x1xf32, #tpu.memory_space<vmem>>, vector<384x1xf32>
    %c0_3 = arith.constant 0 : index
    %c0_4 = arith.constant 0 : index
    %2 = vector.load %arg3[%c0_3, %c0_4] : memref<1x128xi32, #tpu.memory_space<vmem>>, vector<1x128xi32>
    %c0_5 = arith.constant 0 : index
    %c0_6 = arith.constant 0 : index
    %3 = vector.load %arg4[%c0_5, %c0_6] : memref<1x128xf32, #tpu.memory_space<vmem>>, vector<1x128xf32>
    %4 = vector.broadcast %0 : vector<384x1xi32> to vector<384x128xi32>
    %5 = vector.broadcast %2 : vector<1x128xi32> to vector<384x128xi32>
    %6 = arith.cmpi eq, %4, %5 : vector<384x128xi32>
    %7 = vector.broadcast %1 : vector<384x1xf32> to vector<384x128xf32>
    %8 = vector.broadcast %3 : vector<1x128xf32> to vector<384x128xf32>
    %9 = arith.cmpf oge, %7, %8 : vector<384x128xf32>
    %10 = arith.andi %6, %9 : vector<384x128xi1>
    %11 = vector.broadcast %1 : vector<384x1xf32> to vector<384x128xf32>
    %12 = vector.broadcast %3 : vector<1x128xf32> to vector<384x128xf32>
    %13 = arith.subf %11, %12 : vector<384x128xf32>
    %cst = arith.constant 0.000000e+00 : f32
    %14 = vector.broadcast %cst : f32 to vector<384x128xf32>
    %15 = arith.select %10, %13, %14 : vector<384x128xi1>, vector<384x128xf32>
    %cst_7 = arith.constant dense<0.000000e+00> : vector<128xf32>
    %16 = vector.multi_reduction <add>, %15, %cst_7 [0] : vector<384x128xf32> to vector<128xf32>
    %17 = vector.shape_cast %16 : vector<128xf32> to vector<1x128xf32>
    %cst_8 = arith.constant 1.000000e+00 : f32
    %18 = vector.broadcast %cst_8 : f32 to vector<1x128xf32>
    %19 = arith.cmpf olt, %17, %18 : vector<1x128xf32>
    %cst_9 = arith.constant 1.000000e+00 : f32
    %cst_10 = arith.constant 0.000000e+00 : f32
    %20 = vector.broadcast %cst_9 : f32 to vector<1x128xf32>
    %21 = vector.broadcast %cst_10 : f32 to vector<1x128xf32>
    %22 = arith.select %19, %20, %21 : vector<1x128xi1>, vector<1x128xf32>
    %23 = tpu.iota {dimensions = array<i32: 0>} : vector<16x128xi32>
    %24 = vector.broadcast %2 : vector<1x128xi32> to vector<16x128xi32>
    %25 = arith.cmpi eq, %23, %24 : vector<16x128xi32>
    %cst_11 = arith.constant 0.000000e+00 : f32
    %26 = vector.shape_cast %22 : vector<1x128xf32> to vector<1x128xf32>
    %27 = vector.broadcast %26 : vector<1x128xf32> to vector<16x128xf32>
    %28 = vector.broadcast %cst_11 : f32 to vector<16x128xf32>
    %29 = arith.select %25, %27, %28 : vector<16x128xi1>, vector<16x128xf32>
    %cst_12 = arith.constant dense<0.000000e+00> : vector<16xf32>
    %30 = vector.multi_reduction <add>, %29, %cst_12 [1] : vector<16x128xf32> to vector<16xf32>
    %31 = vector.shape_cast %30 : vector<16xf32> to vector<16x1xf32>
    %c0_13 = arith.constant 0 : index
    %c0_14 = arith.constant 0 : index
    %32 = vector.load %arg5[%c0_13, %c0_14] : memref<16x1xf32, #tpu.memory_space<vmem>>, vector<16x1xf32>
    tpu.vector_store %arg5[%c0_13, %c0_14], %31 {strides = array<i32>} : memref<16x1xf32, #tpu.memory_space<vmem>>, vector<16x1xf32>,
    %33 = arith.mulf %22, %3 : vector<1x128xf32>
    %cst_15 = arith.constant 0.000000e+00 : f32
    %34 = vector.shape_cast %33 : vector<1x128xf32> to vector<1x128xf32>
    %35 = vector.broadcast %34 : vector<1x128xf32> to vector<16x128xf32>
    %36 = vector.broadcast %cst_15 : f32 to vector<16x128xf32>
    %37 = arith.select %25, %35, %36 : vector<16x128xi1>, vector<16x128xf32>
    %cst_16 = arith.constant dense<0.000000e+00> : vector<16xf32>
    %38 = vector.multi_reduction <add>, %37, %cst_16 [1] : vector<16x128xf32> to vector<16xf32>
    %39 = vector.shape_cast %38 : vector<16xf32> to vector<16x1xf32>
    %c0_17 = arith.constant 0 : index
    %c0_18 = arith.constant 0 : index
    %40 = vector.load %arg6[%c0_17, %c0_18] : memref<16x1xf32, #tpu.memory_space<vmem>>, vector<16x1xf32>
    tpu.vector_store %arg6[%c0_17, %c0_18], %39 {strides = array<i32>} : memref<16x1xf32, #tpu.memory_space<vmem>>, vector<16x1xf32>,
    return
  }
  func.func @transform_0(%arg0: i32) -> (i32, i32) {
    %c0_i32 = arith.constant 0 : i32
    %c0_i32_0 = arith.constant 0 : i32
    %c0_i32_1 = arith.constant 0 : i32
    return %c0_i32, %c0_i32_0 : i32, i32
  }
  func.func @transform_1(%arg0: i32) -> (i32, i32) {
    %c0_i32 = arith.constant 0 : i32
    %c0_i32_0 = arith.constant 0 : i32
    %c0_i32_1 = arith.constant 0 : i32
    return %c0_i32, %c0_i32_0 : i32, i32
  }
  func.func @transform_2(%arg0: i32) -> (i32, i32) {
    %c0_i32 = arith.constant 0 : i32
    %c0_i32_0 = arith.constant 0 : i32
    return %c0_i32, %arg0 : i32, i32
  }
  func.func @transform_3(%arg0: i32) -> (i32, i32) {
    %c0_i32 = arith.constant 0 : i32
    %c0_i32_0 = arith.constant 0 : i32
    return %c0_i32, %arg0 : i32, i32
  }
  func.func @transform_4(%arg0: i32) -> (i32, i32) {
    %c0_i32 = arith.constant 0 : i32
    %c0_i32_0 = arith.constant 0 : i32
    return %arg0, %c0_i32 : i32, i32
  }
  func.func @transform_5(%arg0: i32) -> (i32, i32) {
    %c0_i32 = arith.constant 0 : i32
    %c0_i32_0 = arith.constant 0 : i32
    return %arg0, %c0_i32 : i32, i32
  }
}

</mosaic_0001>

<llo_original>
// kernel: tpu_custom_call.1
$region0: #{tpu_custom_call.1}
  #allocation0 [shape = 'u32[]', space=smem, size = 0x4, offset = 0x4, fixed_abs, tag = 'smem constant byte address 0x4 - core index']
  #allocation1 [shape = 'u32[144,128]{1,0:T(1,128)}', space=vmem, size = 0x12000, scoped, tag = 'internal scratch']
  %s0 = inlined_call_operand.vmem [shape: s32[384,1], index: 0, kind: input, shape index: {}]
  %s1 = inlined_call_operand.vmem [shape: f32[384,1], index: 1, kind: input, shape index: {}]
  %s2 = inlined_call_operand.vmem [shape: s32[1,384], index: 2, kind: input, shape index: {}]
  %s3 = inlined_call_operand.vmem [shape: f32[1,384], index: 3, kind: input, shape index: {}]
  %s4 = inlined_call_operand.vmem [shape: f32[48,1], index: 4, kind: output, shape index: {0}]
  %s5 = inlined_call_operand.vmem [shape: f32[48,1], index: 5, kind: output, shape index: {1}]
  %6 = xla_tuple %s4, %s5
  %s7 = sld [smem:[#allocation0]]
  $region57: #{tpu_custom_call.1} parent=0
    _
  %s9 = ssub.s32 1, %s7
  %s10 = scalar_select 0, %s9, %s7
  loop: start=0, step=1, limit=5
  $region2: #{tpu_custom_call.1} parent=0 // loop_pre_header
    _
  $region3: #{tpu_custom_call.1} parent=0 // loop_header
    %s12 = sphi 0, %s16
    %p13 = scmp.ge.s32.totalorder %s12, 5
    %s20 = sphi 0, %s20
    %s22 = sphi 0, %s20
    %s23 = sphi 0, %s22
    %s37 = sphi 0, %s23
    %s41 = sphi 0, %s41
    %s43 = sphi 0, %s41
    %s44 = sphi 0, %s43
    %s58 = sphi 0, %s44
    %s64 = sphi 0, %s66
    %s67 = sphi 0, %s64
    %s68 = sphi 0, %s67
    %s84 = sphi 0, %s68
    %s90 = sphi 0, %s92
    %s93 = sphi 0, %s90
    %s94 = sphi 0, %s93
    %s110 = sphi 0, %s94
    %s116 = sphi 0, %s118
    %s119 = sphi 0, %s116
    %s120 = sphi 0, %s119
    %s136 = sphi 0, %s120
    %s142 = sphi 0, %s144
    %s145 = sphi 0, %s142
    %s146 = sphi 0, %s145
    %s162 = sphi 0, %s146
  $region4: #{tpu_custom_call.1} parent=0 // loop_header_branch
    %15 = sbr.rel (%p13) target = $region8
  $region5: #{tpu_custom_call.1} parent=0 // loop_body
    %s17 = ssub.s32 %s12, 1
    %s18 = ssub.s32 %s12, 2
    %s19 = sadd.s32 %s12, 1
    %s21 = sadd.s32 %s20, 1
    %p24 = scmp.eq.s32.totalorder %s12, 2
    %p25 = scmp.ne.s32.totalorder %s20, %s22
    %p26 = scmp.eq.s32.totalorder %s12, 0
    %p27 = por %p25, %p26
    %p28 = scmp.ne.s32.totalorder %s20, %s22
    %p29 = scmp.eq.s32.totalorder %s17, 2
    %p30 = por %p28, %p29
    %p31 = scmp.ne.s32.totalorder %s22, %s23
    %p32 = scmp.eq.s32.totalorder %s17, 0
    %p33 = por %p31, %p32
    %p34 = scmp.ne.s32.totalorder %s22, %s23
    %p35 = scmp.eq.s32.totalorder %s18, 2
    %p36 = por %p34, %p35
    %p38 = scmp.ne.s32.totalorder %s23, %s37
    %p39 = scmp.eq.s32.totalorder %s18, 0
    %p40 = por %p38, %p39
    %s42 = sadd.s32 %s41, 1
    %p45 = scmp.eq.s32.totalorder %s12, 2
    %p46 = scmp.ne.s32.totalorder %s41, %s43
    %p47 = scmp.eq.s32.totalorder %s12, 0
    %p48 = por %p46, %p47
    %p49 = scmp.ne.s32.totalorder %s41, %s43
    %p50 = scmp.eq.s32.totalorder %s17, 2
    %p51 = por %p49, %p50
    %p52 = scmp.ne.s32.totalorder %s43, %s44
    %p53 = scmp.eq.s32.totalorder %s17, 0
    %p54 = por %p52, %p53
    %p55 = scmp.ne.s32.totalorder %s43, %s44
    %p56 = scmp.eq.s32.totalorder %s18, 2
    %p57 = por %p55, %p56
    %p59 = scmp.ne.s32.totalorder %s44, %s58
    %p60 = scmp.eq.s32.totalorder %s18, 0
    %p61 = por %p59, %p60
    %s62 = ssub.s32 %s12, %s19
    %p63 = scmp.eq.s32.totalorder %s62, 0
    %s65 = sadd.s32 %s64, 1
    %s66 = scalar_select %p63, %s64, %s65
    %p69 = pneg %p63
    %p70 = scmp.eq.s32.totalorder %s12, 2
    %p71 = por %p69, %p70
    %p72 = scmp.ne.s32.totalorder %s64, %s67
    %p73 = scmp.eq.s32.totalorder %s12, 0
    %p74 = por %p72, %p73
    %p75 = scmp.ne.s32.totalorder %s64, %s67
    %p76 = scmp.eq.s32.totalorder %s17, 2
    %p77 = por %p75, %p76
    %p78 = scmp.ne.s32.totalorder %s67, %s68
    %p79 = scmp.eq.s32.totalorder %s17, 0
    %p80 = por %p78, %p79
    %p81 = scmp.ne.s32.totalorder %s67, %s68
    %p82 = scmp.eq.s32.totalorder %s18, 2
    %p83 = por %p81, %p82
    %p85 = scmp.ne.s32.totalorder %s68, %s84
    %p86 = scmp.eq.s32.totalorder %s18, 0
    %p87 = por %p85, %p86
    %s88 = ssub.s32 %s12, %s19
    %p89 = scmp.eq.s32.totalorder %s88, 0
    %s91 = sadd.s32 %s90, 1
    %s92 = scalar_select %p89, %s90, %s91
    %p95 = pneg %p89
    %p96 = scmp.eq.s32.totalorder %s12, 2
    %p97 = por %p95, %p96
    %p98 = scmp.ne.s32.totalorder %s90, %s93
    %p99 = scmp.eq.s32.totalorder %s12, 0
    %p100 = por %p98, %p99
    %p101 = scmp.ne.s32.totalorder %s90, %s93
    %p102 = scmp.eq.s32.totalorder %s17, 2
    %p103 = por %p101, %p102
    %p104 = scmp.ne.s32.totalorder %s93, %s94
    %p105 = scmp.eq.s32.totalorder %s17, 0
    %p106 = por %p104, %p105
    %p107 = scmp.ne.s32.totalorder %s93, %s94
    %p108 = scmp.eq.s32.totalorder %s18, 2
    %p109 = por %p107, %p108
    %p111 = scmp.ne.s32.totalorder %s94, %s110
    %p112 = scmp.eq.s32.totalorder %s18, 0
    %p113 = por %p111, %p112
    %s114 = ssub.s32 %s12, %s19
    %p115 = scmp.eq.s32.totalorder %s114, 0
    %s117 = sadd.s32 %s116, 1
    %s118 = scalar_select %p115, %s116, %s117
    %p121 = pneg %p115
    %p122 = scmp.eq.s32.totalorder %s12, 2
    %p123 = por %p121, %p122
    %p124 = scmp.ne.s32.totalorder %s116, %s119
    %p125 = scmp.eq.s32.totalorder %s12, 0
    %p126 = por %p124, %p125
    %p127 = scmp.ne.s32.totalorder %s116, %s119
    %p128 = scmp.eq.s32.totalorder %s17, 2
    %p129 = por %p127, %p128
    %p130 = scmp.ne.s32.totalorder %s119, %s120
    %p131 = scmp.eq.s32.totalorder %s17, 0
    %p132 = por %p130, %p131
    %p133 = scmp.ne.s32.totalorder %s119, %s120
    %p134 = scmp.eq.s32.totalorder %s18, 2
    %p135 = por %p133, %p134
    %p137 = scmp.ne.s32.totalorder %s120, %s136
    %p138 = scmp.eq.s32.totalorder %s18, 0
    %p139 = por %p137, %p138
    %s140 = ssub.s32 %s12, %s19
    %p141 = scmp.eq.s32.totalorder %s140, 0
    %s143 = sadd.s32 %s142, 1
    %s144 = scalar_select %p141, %s142, %s143
    %p147 = pneg %p141
    %p148 = scmp.eq.s32.totalorder %s12, 2
    %p149 = por %p147, %p148
    %p150 = scmp.ne.s32.totalorder %s142, %s145
    %p151 = scmp.eq.s32.totalorder %s12, 0
    %p152 = por %p150, %p151
    %p153 = scmp.ne.s32.totalorder %s142, %s145
    %p154 = scmp.eq.s32.totalorder %s17, 2
    %p155 = por %p153, %p154
    %p156 = scmp.ne.s32.totalorder %s145, %s146
    %p157 = scmp.eq.s32.totalorder %s17, 0
    %p158 = por %p156, %p157
    %p159 = scmp.ne.s32.totalorder %s145, %s146
    %p160 = scmp.eq.s32.totalorder %s18, 2
    %p161 = por %p159, %p160
    %p163 = scmp.ne.s32.totalorder %s146, %s162
    %p164 = scmp.eq.s32.totalorder %s18, 0
    %p165 = por %p163, %p164
    %p166 = scmp.le.s32.totalorder 1, %s12
    %p167 = scmp.lt.s32.totalorder %s12, 4
    %p168 = pnand %p166, %p167
    %p169 = pneg %p168
    // Predicated region
    $region9: #{tpu_custom_call.1} parent=5 // pred_check
      _
    $region10: #{tpu_custom_call.1} parent=5 // pred_check_branch
      %171 = sbr.rel (%p168) target = $region12
    $region11: #{tpu_custom_call.1} parent=5 // pred_region
      %s172 = ssub.s32 %s12, 1
      // Predicated region
      $region13: #{tpu_custom_call.1} parent=11 // pred_check
        %p173 = pneg %p33
      $region14: #{tpu_custom_call.1} parent=11 // pred_check_branch
        %175 = sbr.rel (%p173) target = $region16
      $region15: #{tpu_custom_call.1} parent=11 // pred_region
        _
      $region16: #{tpu_custom_call.1} parent=11 // pred_fallthru
        _
      // Predicated region
      $region17: #{tpu_custom_call.1} parent=11 // pred_check
        %p176 = pneg %p54
      $region18: #{tpu_custom_call.1} parent=11 // pred_check_branch
        %178 = sbr.rel (%p176) target = $region20
      $region19: #{tpu_custom_call.1} parent=11 // pred_region
        _
      $region20: #{tpu_custom_call.1} parent=11 // pred_fallthru
        _
    $region12: #{tpu_custom_call.1} parent=5 // pred_fallthru
      _
    %p179 = scmp.lt.s32.totalorder %s12, 3
    // Predicated region
    $region21: #{tpu_custom_call.1} parent=5 // pred_check
      %p180 = pneg %p179
    $region22: #{tpu_custom_call.1} parent=5 // pred_check_branch
      %182 = sbr.rel (%p180) target = $region24
    $region23: #{tpu_custom_call.1} parent=5 // pred_region
      // Predicated region
      $region25: #{tpu_custom_call.1} parent=23 // pred_check
        %p183 = pneg %p74
      $region26: #{tpu_custom_call.1} parent=23 // pred_check_branch
        %185 = sbr.rel (%p183) target = $region28
      $region27: #{tpu_custom_call.1} parent=23 // pred_region
        %p186 = scmp.lt.s32.totalorder %s12, 2
        %s187 = scalar_select %p186, %s12, 2
        %s188 = scalar_lea.vmem %s2, %s187
      $region28: #{tpu_custom_call.1} parent=23 // pred_fallthru
        _
      // Predicated region
      $region29: #{tpu_custom_call.1} parent=23 // pred_check
        %p189 = pneg %p100
      $region30: #{tpu_custom_call.1} parent=23 // pred_check_branch
        %191 = sbr.rel (%p189) target = $region32
      $region31: #{tpu_custom_call.1} parent=23 // pred_region
        %p192 = scmp.lt.s32.totalorder %s12, 2
        %s193 = scalar_select %p192, %s12, 2
        %s194 = scalar_lea.vmem %s3, %s193
      $region32: #{tpu_custom_call.1} parent=23 // pred_fallthru
        _
    $region24: #{tpu_custom_call.1} parent=5 // pred_fallthru
      _
    %p195 = scmp.le.s32.totalorder 1, %s12
    %p196 = scmp.lt.s32.totalorder %s12, 4
    %p197 = pnand %p195, %p196
    %p198 = pneg %p197
    // Predicated region
    $region33: #{tpu_custom_call.1} parent=5 // pred_check
      _
    $region34: #{tpu_custom_call.1} parent=5 // pred_check_branch
      %200 = sbr.rel (%p197) target = $region36
    $region35: #{tpu_custom_call.1} parent=5 // pred_region
      %s201 = ssub.s32 %s12, 1
      %p202 = pneg %p33
      %p203 = pneg %p30
      %p204 = pneg %p54
      %p205 = pneg %p51
      %p206 = scmp.lt.s32.totalorder %s17, 2
      %s207 = scalar_select %p206, %s17, 2
      %s208 = scalar_lea.vmem %s2, %s207
      %p209 = pneg %p80
      %p210 = pneg %p77
      %p211 = scmp.lt.s32.totalorder %s17, 2
      %s212 = scalar_select %p211, %s17, 2
      %s213 = scalar_lea.vmem %s3, %s212
      %p214 = pneg %p106
      %p215 = pneg %p103
      %p216 = pneg %p132
      %p217 = pneg %p129
      %s218 = smul.u32 2, %s17
      %p219 = scmp.lt.s32.totalorder %s218, 5
      %s220 = scalar_select %p219, %s218, 5
      %s221 = smul.addr %s220, 8
      %s222 = scalar_lea.vmem %s4, %s221
      %p223 = pneg %p158
      %p224 = pneg %p155
      %s225 = smul.u32 2, %s17
      %p226 = scmp.lt.s32.totalorder %s225, 5
      %s227 = scalar_select %p226, %s225, 5
      %s228 = smul.addr %s227, 8
      %s229 = scalar_lea.vmem %s5, %s228
      %p230 = scmp.lt.s32.totalorder %s17, 2
      %s231 = scalar_select %p230, %s17, 2
      %s232 = scalar_lea.vmem %s2, %s231
      %p233 = scmp.lt.s32.totalorder %s17, 2
      %s234 = scalar_select %p233, %s17, 2
      %s235 = scalar_lea.vmem %s3, %s234
      %s236 = smul.u32 2, %s17
      %p237 = scmp.lt.s32.totalorder %s236, 5
      %s238 = scalar_select %p237, %s236, 5
      %s239 = smul.addr %s238, 8
      %s240 = scalar_lea.vmem %s4, %s239
      %s241 = smul.u32 2, %s17
      %s242 = smul.u32 2, %s17
      %p243 = scmp.lt.s32.totalorder %s242, 5
      %s244 = scalar_select %p243, %s242, 5
      %s245 = smul.addr %s244, 8
      %s246 = scalar_lea.vmem %s5, %s245
      %s247 = smul.u32 2, %s17
      %v248 = vld [vmem:[%s0] sm:$0xff]
      %v249 = vld [vmem:[%s0 + $0x8] sm:$0xff]
      %v250 = vld [vmem:[%s0 + $0x10] sm:$0xff]
      %v251 = vld [vmem:[%s0 + $0x18] sm:$0xff]
      %v252 = vld [vmem:[%s0 + $0x20] sm:$0xff]
      %v253 = vld [vmem:[%s0 + $0x28] sm:$0xff]
      %v254 = vld [vmem:[%s0 + $0x30] sm:$0xff]
      %v255 = vld [vmem:[%s0 + $0x38] sm:$0xff]
      %v256 = vld [vmem:[%s0 + $0x40] sm:$0xff]
      %v257 = vld [vmem:[%s0 + $0x48] sm:$0xff]
      %v258 = vld [vmem:[%s0 + $0x50] sm:$0xff]
      %v259 = vld [vmem:[%s0 + $0x58] sm:$0xff]
      %v260 = vld [vmem:[%s0 + $0x60] sm:$0xff]
      %v261 = vld [vmem:[%s0 + $0x68] sm:$0xff]
      %v262 = vld [vmem:[%s0 + $0x70] sm:$0xff]
      %v263 = vld [vmem:[%s0 + $0x78] sm:$0xff]
      %v264 = vld [vmem:[%s0 + $0x80] sm:$0xff]
      %v265 = vld [vmem:[%s0 + $0x88] sm:$0xff]
      %v266 = vld [vmem:[%s0 + $0x90] sm:$0xff]
      %v267 = vld [vmem:[%s0 + $0x98] sm:$0xff]
      %v268 = vld [vmem:[%s0 + $0xa0] sm:$0xff]
      %v269 = vld [vmem:[%s0 + $0xa8] sm:$0xff]
      %v270 = vld [vmem:[%s0 + $0xb0] sm:$0xff]
      %v271 = vld [vmem:[%s0 + $0xb8] sm:$0xff]
      %v272 = vld [vmem:[%s0 + $0xc0] sm:$0xff]
      %v273 = vld [vmem:[%s0 + $0xc8] sm:$0xff]
      %v274 = vld [vmem:[%s0 + $0xd0] sm:$0xff]
      %v275 = vld [vmem:[%s0 + $0xd8] sm:$0xff]
      %v276 = vld [vmem:[%s0 + $0xe0] sm:$0xff]
      %v277 = vld [vmem:[%s0 + $0xe8] sm:$0xff]
      %v278 = vld [vmem:[%s0 + $0xf0] sm:$0xff]
      %v279 = vld [vmem:[%s0 + $0xf8] sm:$0xff]
      %v280 = vld [vmem:[%s0 + $0x100] sm:$0xff]
      %v281 = vld [vmem:[%s0 + $0x108] sm:$0xff]
      %v282 = vld [vmem:[%s0 + $0x110] sm:$0xff]
      %v283 = vld [vmem:[%s0 + $0x118] sm:$0xff]
      %v284 = vld [vmem:[%s0 + $0x120] sm:$0xff]
      %v285 = vld [vmem:[%s0 + $0x128] sm:$0xff]
      %v286 = vld [vmem:[%s0 + $0x130] sm:$0xff]
      %v287 = vld [vmem:[%s0 + $0x138] sm:$0xff]
      %v288 = vld [vmem:[%s0 + $0x140] sm:$0xff]
      %v289 = vld [vmem:[%s0 + $0x148] sm:$0xff]
      %v290 = vld [vmem:[%s0 + $0x150] sm:$0xff]
      %v291 = vld [vmem:[%s0 + $0x158] sm:$0xff]
      %v292 = vld [vmem:[%s0 + $0x160] sm:$0xff]
      %v293 = vld [vmem:[%s0 + $0x168] sm:$0xff]
      %v294 = vld [vmem:[%s0 + $0x170] sm:$0xff]
      %v295 = vld [vmem:[%s0 + $0x178] sm:$0xff]
      %v296 = vld [vmem:[%s1] sm:$0xff]
      %v297 = vld [vmem:[%s1 + $0x8] sm:$0xff]
      %v298 = vld [vmem:[%s1 + $0x10] sm:$0xff]
      %v299 = vld [vmem:[%s1 + $0x18] sm:$0xff]
      %v300 = vld [vmem:[%s1 + $0x20] sm:$0xff]
      %v301 = vld [vmem:[%s1 + $0x28] sm:$0xff]
      %v302 = vld [vmem:[%s1 + $0x30] sm:$0xff]
      %v303 = vld [vmem:[%s1 + $0x38] sm:$0xff]
      %v304 = vld [vmem:[%s1 + $0x40] sm:$0xff]
      %v305 = vld [vmem:[%s1 + $0x48] sm:$0xff]
      %v306 = vld [vmem:[%s1 + $0x50] sm:$0xff]
      %v307 = vld [vmem:[%s1 + $0x58] sm:$0xff]
      %v308 = vld [vmem:[%s1 + $0x60] sm:$0xff]
      %v309 = vld [vmem:[%s1 + $0x68] sm:$0xff]
      %v310 = vld [vmem:[%s1 + $0x70] sm:$0xff]
      %v311 = vld [vmem:[%s1 + $0x78] sm:$0xff]
      %v312 = vld [vmem:[%s1 + $0x80] sm:$0xff]
      %v313 = vld [vmem:[%s1 + $0x88] sm:$0xff]
      %v314 = vld [vmem:[%s1 + $0x90] sm:$0xff]
      %v315 = vld [vmem:[%s1 + $0x98] sm:$0xff]
      %v316 = vld [vmem:[%s1 + $0xa0] sm:$0xff]
      %v317 = vld [vmem:[%s1 + $0xa8] sm:$0xff]
      %v318 = vld [vmem:[%s1 + $0xb0] sm:$0xff]
      %v319 = vld [vmem:[%s1 + $0xb8] sm:$0xff]
      %v320 = vld [vmem:[%s1 + $0xc0] sm:$0xff]
      %v321 = vld [vmem:[%s1 + $0xc8] sm:$0xff]
      %v322 = vld [vmem:[%s1 + $0xd0] sm:$0xff]
      %v323 = vld [vmem:[%s1 + $0xd8] sm:$0xff]
      %v324 = vld [vmem:[%s1 + $0xe0] sm:$0xff]
      %v325 = vld [vmem:[%s1 + $0xe8] sm:$0xff]
      %v326 = vld [vmem:[%s1 + $0xf0] sm:$0xff]
      %v327 = vld [vmem:[%s1 + $0xf8] sm:$0xff]
      %v328 = vld [vmem:[%s1 + $0x100] sm:$0xff]
      %v329 = vld [vmem:[%s1 + $0x108] sm:$0xff]
      %v330 = vld [vmem:[%s1 + $0x110] sm:$0xff]
      %v331 = vld [vmem:[%s1 + $0x118] sm:$0xff]
      %v332 = vld [vmem:[%s1 + $0x120] sm:$0xff]
      %v333 = vld [vmem:[%s1 + $0x128] sm:$0xff]
      %v334 = vld [vmem:[%s1 + $0x130] sm:$0xff]
      %v335 = vld [vmem:[%s1 + $0x138] sm:$0xff]
      %v336 = vld [vmem:[%s1 + $0x140] sm:$0xff]
      %v337 = vld [vmem:[%s1 + $0x148] sm:$0xff]
      %v338 = vld [vmem:[%s1 + $0x150] sm:$0xff]
      %v339 = vld [vmem:[%s1 + $0x158] sm:$0xff]
      %v340 = vld [vmem:[%s1 + $0x160] sm:$0xff]
      %v341 = vld [vmem:[%s1 + $0x168] sm:$0xff]
      %v342 = vld [vmem:[%s1 + $0x170] sm:$0xff]
      %v343 = vld [vmem:[%s1 + $0x178] sm:$0xff]
      %v344 = vld [vmem:[%s232] sm:$0x1]
      %v345 = vld [vmem:[%s235] sm:$0x1]
      %346 = vset.pattern.permute.xlu0 0
      %347 = vperm.xlu0 %346, %v248
      %v348 = vpop.permute.xlu0 %347
      %349 = vset.pattern.permute.xlu0 0
      %350 = vperm.xlu0 %349, %v249
      %v351 = vpop.permute.xlu0 %350
      %352 = vset.pattern.permute.xlu0 0
      %353 = vperm.xlu0 %352, %v250
      %v354 = vpop.permute.xlu0 %353
      %355 = vset.pattern.permute.xlu0 0
      %356 = vperm.xlu0 %355, %v251
      %v357 = vpop.permute.xlu0 %356
      %358 = vset.pattern.permute.xlu0 0
      %359 = vperm.xlu0 %358, %v252
      %v360 = vpop.permute.xlu0 %359
      %361 = vset.pattern.permute.xlu0 0
      %362 = vperm.xlu0 %361, %v253
      %v363 = vpop.permute.xlu0 %362
      %364 = vset.pattern.permute.xlu0 0
      %365 = vperm.xlu0 %364, %v254
      %v366 = vpop.permute.xlu0 %365
      %367 = vset.pattern.permute.xlu0 0
      %368 = vperm.xlu0 %367, %v255
      %v369 = vpop.permute.xlu0 %368
      %370 = vset.pattern.permute.xlu0 0
      %371 = vperm.xlu0 %370, %v256
      %v372 = vpop.permute.xlu0 %371
      %373 = vset.pattern.permute.xlu0 0
      %374 = vperm.xlu0 %373, %v257
      %v375 = vpop.permute.xlu0 %374
      %376 = vset.pattern.permute.xlu0 0
      %377 = vperm.xlu0 %376, %v258
      %v378 = vpop.permute.xlu0 %377
      %379 = vset.pattern.permute.xlu0 0
      %380 = vperm.xlu0 %379, %v259
      %v381 = vpop.permute.xlu0 %380
      %382 = vset.pattern.permute.xlu0 0
      %383 = vperm.xlu0 %382, %v260
      %v384 = vpop.permute.xlu0 %383
      %385 = vset.pattern.permute.xlu0 0
      %386 = vperm.xlu0 %385, %v261
      %v387 = vpop.permute.xlu0 %386
      %388 = vset.pattern.permute.xlu0 0
      %389 = vperm.xlu0 %388, %v262
      %v390 = vpop.permute.xlu0 %389
      %391 = vset.pattern.permute.xlu0 0
      %392 = vperm.xlu0 %391, %v263
      %v393 = vpop.permute.xlu0 %392
      %394 = vset.pattern.permute.xlu0 0
      %395 = vperm.xlu0 %394, %v264
      %v396 = vpop.permute.xlu0 %395
      %397 = vset.pattern.permute.xlu0 0
      %398 = vperm.xlu0 %397, %v265
      %v399 = vpop.permute.xlu0 %398
      %400 = vset.pattern.permute.xlu0 0
      %401 = vperm.xlu0 %400, %v266
      %v402 = vpop.permute.xlu0 %401
      %403 = vset.pattern.permute.xlu0 0
      %404 = vperm.xlu0 %403, %v267
      %v405 = vpop.permute.xlu0 %404
      %406 = vset.pattern.permute.xlu0 0
      %407 = vperm.xlu0 %406, %v268
      %v408 = vpop.permute.xlu0 %407
      %409 = vset.pattern.permute.xlu0 0
      %410 = vperm.xlu0 %409, %v269
      %v411 = vpop.permute.xlu0 %410
      %412 = vset.pattern.permute.xlu0 0
      %413 = vperm.xlu0 %412, %v270
      %v414 = vpop.permute.xlu0 %413
      %415 = vset.pattern.permute.xlu0 0
      %416 = vperm.xlu0 %415, %v271
      %v417 = vpop.permute.xlu0 %416
      %418 = vset.pattern.permute.xlu0 0
      %419 = vperm.xlu0 %418, %v272
      %v420 = vpop.permute.xlu0 %419
      %421 = vset.pattern.permute.xlu0 0
      %422 = vperm.xlu0 %421, %v273
      %v423 = vpop.permute.xlu0 %422
      %424 = vset.pattern.permute.xlu0 0
      %425 = vperm.xlu0 %424, %v274
      %v426 = vpop.permute.xlu0 %425
      %427 = vset.pattern.permute.xlu0 0
      %428 = vperm.xlu0 %427, %v275
      %v429 = vpop.permute.xlu0 %428
      %430 = vset.pattern.permute.xlu0 0
      %431 = vperm.xlu0 %430, %v276
      %v432 = vpop.permute.xlu0 %431
      %433 = vset.pattern.permute.xlu0 0
      %434 = vperm.xlu0 %433, %v277
      %v435 = vpop.permute.xlu0 %434
      %436 = vset.pattern.permute.xlu0 0
      %437 = vperm.xlu0 %436, %v278
      %v438 = vpop.permute.xlu0 %437
      %439 = vset.pattern.permute.xlu0 0
      %440 = vperm.xlu0 %439, %v279
      %v441 = vpop.permute.xlu0 %440
      %442 = vset.pattern.permute.xlu0 0
      %443 = vperm.xlu0 %442, %v280
      %v444 = vpop.permute.xlu0 %443
      %445 = vset.pattern.permute.xlu0 0
      %446 = vperm.xlu0 %445, %v281
      %v447 = vpop.permute.xlu0 %446
      %448 = vset.pattern.permute.xlu0 0
      %449 = vperm.xlu0 %448, %v282
      %v450 = vpop.permute.xlu0 %449
      %451 = vset.pattern.permute.xlu0 0
      %452 = vperm.xlu0 %451, %v283
      %v453 = vpop.permute.xlu0 %452
      %454 = vset.pattern.permute.xlu0 0
      %455 = vperm.xlu0 %454, %v284
      %v456 = vpop.permute.xlu0 %455
      %457 = vset.pattern.permute.xlu0 0
      %458 = vperm.xlu0 %457, %v285
      %v459 = vpop.permute.xlu0 %458
      %460 = vset.pattern.permute.xlu0 0
      %461 = vperm.xlu0 %460, %v286
      %v462 = vpop.permute.xlu0 %461
      %463 = vset.pattern.permute.xlu0 0
      %464 = vperm.xlu0 %463, %v287
      %v465 = vpop.permute.xlu0 %464
      %466 = vset.pattern.permute.xlu0 0
      %467 = vperm.xlu0 %466, %v288
      %v468 = vpop.permute.xlu0 %467
      %469 = vset.pattern.permute.xlu0 0
      %470 = vperm.xlu0 %469, %v289
      %v471 = vpop.permute.xlu0 %470
      %472 = vset.pattern.permute.xlu0 0
      %473 = vperm.xlu0 %472, %v290
      %v474 = vpop.permute.xlu0 %473
      %475 = vset.pattern.permute.xlu0 0
      %476 = vperm.xlu0 %475, %v291
      %v477 = vpop.permute.xlu0 %476
      %478 = vset.pattern.permute.xlu0 0
      %479 = vperm.xlu0 %478, %v292
      %v480 = vpop.permute.xlu0 %479
      %481 = vset.pattern.permute.xlu0 0
      %482 = vperm.xlu0 %481, %v293
      %v483 = vpop.permute.xlu0 %482
      %484 = vset.pattern.permute.xlu0 0
      %485 = vperm.xlu0 %484, %v294
      %v486 = vpop.permute.xlu0 %485
      %487 = vset.pattern.permute.xlu0 0
      %488 = vperm.xlu0 %487, %v295
      %v489 = vpop.permute.xlu0 %488
      %v490 = vlaneseq
      %v491 = vshrl.u32 %v490, 7
      %v492 = vsub.s32 0, %v491
      %v493 = vrot.slane %v344, %v492
      %vm494 = vcmp.eq.s32.totalorder %v348, %v493
      %vm495 = vcmp.eq.s32.totalorder %v351, %v493
      %vm496 = vcmp.eq.s32.totalorder %v354, %v493
      %vm497 = vcmp.eq.s32.totalorder %v357, %v493
      %vm498 = vcmp.eq.s32.totalorder %v360, %v493
      %vm499 = vcmp.eq.s32.totalorder %v363, %v493
      %vm500 = vcmp.eq.s32.totalorder %v366, %v493
      %vm501 = vcmp.eq.s32.totalorder %v369, %v493
      %vm502 = vcmp.eq.s32.totalorder %v372, %v493
      %vm503 = vcmp.eq.s32.totalorder %v375, %v493
      %vm504 = vcmp.eq.s32.totalorder %v378, %v493
      %vm505 = vcmp.eq.s32.totalorder %v381, %v493
      %vm506 = vcmp.eq.s32.totalorder %v384, %v493
      %vm507 = vcmp.eq.s32.totalorder %v387, %v493
      %vm508 = vcmp.eq.s32.totalorder %v390, %v493
      %vm509 = vcmp.eq.s32.totalorder %v393, %v493
      %vm510 = vcmp.eq.s32.totalorder %v396, %v493
      %vm511 = vcmp.eq.s32.totalorder %v399, %v493
      %vm512 = vcmp.eq.s32.totalorder %v402, %v493
      %vm513 = vcmp.eq.s32.totalorder %v405, %v493
      %vm514 = vcmp.eq.s32.totalorder %v408, %v493
      %vm515 = vcmp.eq.s32.totalorder %v411, %v493
      %vm516 = vcmp.eq.s32.totalorder %v414, %v493
      %vm517 = vcmp.eq.s32.totalorder %v417, %v493
      %vm518 = vcmp.eq.s32.totalorder %v420, %v493
      %vm519 = vcmp.eq.s32.totalorder %v423, %v493
      %vm520 = vcmp.eq.s32.totalorder %v426, %v493
      %vm521 = vcmp.eq.s32.totalorder %v429, %v493
      %vm522 = vcmp.eq.s32.totalorder %v432, %v493
      %vm523 = vcmp.eq.s32.totalorder %v435, %v493
      %vm524 = vcmp.eq.s32.totalorder %v438, %v493
      %vm525 = vcmp.eq.s32.totalorder %v441, %v493
      %vm526 = vcmp.eq.s32.totalorder %v444, %v493
      %vm527 = vcmp.eq.s32.totalorder %v447, %v493
      %vm528 = vcmp.eq.s32.totalorder %v450, %v493
      %vm529 = vcmp.eq.s32.totalorder %v453, %v493
      %vm530 = vcmp.eq.s32.totalorder %v456, %v493
      %vm531 = vcmp.eq.s32.totalorder %v459, %v493
      %vm532 = vcmp.eq.s32.totalorder %v462, %v493
      %vm533 = vcmp.eq.s32.totalorder %v465, %v493
      %vm534 = vcmp.eq.s32.totalorder %v468, %v493
      %vm535 = vcmp.eq.s32.totalorder %v471, %v493
      %vm536 = vcmp.eq.s32.totalorder %v474, %v493
      %vm537 = vcmp.eq.s32.totalorder %v477, %v493
      %vm538 = vcmp.eq.s32.totalorder %v480, %v493
      %vm539 = vcmp.eq.s32.totalorder %v483, %v493
      %vm540 = vcmp.eq.s32.totalorder %v486, %v493
      %vm541 = vcmp.eq.s32.totalorder %v489, %v493
      %543 = vset.pattern.permute.xlu0 0
      %544 = vperm.xlu0 %543, %v296
      %v545 = vpop.permute.xlu0 %544
      %548 = vset.pattern.permute.xlu0 0
      %549 = vperm.xlu0 %548, %v297
      %v550 = vpop.permute.xlu0 %549
      %553 = vset.pattern.permute.xlu0 0
      %554 = vperm.xlu0 %553, %v298
      %v555 = vpop.permute.xlu0 %554
      %558 = vset.pattern.permute.xlu0 0
      %559 = vperm.xlu0 %558, %v299
      %v560 = vpop.permute.xlu0 %559
      %563 = vset.pattern.permute.xlu0 0
      %564 = vperm.xlu0 %563, %v300
      %v565 = vpop.permute.xlu0 %564
      %568 = vset.pattern.permute.xlu0 0
      %569 = vperm.xlu0 %568, %v301
      %v570 = vpop.permute.xlu0 %569
      %573 = vset.pattern.permute.xlu0 0
      %574 = vperm.xlu0 %573, %v302
      %v575 = vpop.permute.xlu0 %574
      %578 = vset.pattern.permute.xlu0 0
      %579 = vperm.xlu0 %578, %v303
      %v580 = vpop.permute.xlu0 %579
      %583 = vset.pattern.permute.xlu0 0
      %584 = vperm.xlu0 %583, %v304
      %v585 = vpop.permute.xlu0 %584
      %588 = vset.pattern.permute.xlu0 0
      %589 = vperm.xlu0 %588, %v305
      %v590 = vpop.permute.xlu0 %589
      %593 = vset.pattern.permute.xlu0 0
      %594 = vperm.xlu0 %593, %v306
      %v595 = vpop.permute.xlu0 %594
      %598 = vset.pattern.permute.xlu0 0
      %599 = vperm.xlu0 %598, %v307
      %v600 = vpop.permute.xlu0 %599
      %603 = vset.pattern.permute.xlu0 0
      %604 = vperm.xlu0 %603, %v308
      %v605 = vpop.permute.xlu0 %604
      %608 = vset.pattern.permute.xlu0 0
      %609 = vperm.xlu0 %608, %v309
      %v610 = vpop.permute.xlu0 %609
      %613 = vset.pattern.permute.xlu0 0
      %614 = vperm.xlu0 %613, %v310
      %v615 = vpop.permute.xlu0 %614
      %618 = vset.pattern.permute.xlu0 0
      %619 = vperm.xlu0 %618, %v311
      %v620 = vpop.permute.xlu0 %619
      %623 = vset.pattern.permute.xlu0 0
      %624 = vperm.xlu0 %623, %v312
      %v625 = vpop.permute.xlu0 %624
      %628 = vset.pattern.permute.xlu0 0
      %629 = vperm.xlu0 %628, %v313
      %v630 = vpop.permute.xlu0 %629
      %633 = vset.pattern.permute.xlu0 0
      %634 = vperm.xlu0 %633, %v314
      %v635 = vpop.permute.xlu0 %634
      %638 = vset.pattern.permute.xlu0 0
      %639 = vperm.xlu0 %638, %v315
      %v640 = vpop.permute.xlu0 %639
      %643 = vset.pattern.permute.xlu0 0
      %644 = vperm.xlu0 %643, %v316
      %v645 = vpop.permute.xlu0 %644
      %648 = vset.pattern.permute.xlu0 0
      %649 = vperm.xlu0 %648, %v317
      %v650 = vpop.permute.xlu0 %649
      %653 = vset.pattern.permute.xlu0 0
      %654 = vperm.xlu0 %653, %v318
      %v655 = vpop.permute.xlu0 %654
      %658 = vset.pattern.permute.xlu0 0
      %659 = vperm.xlu0 %658, %v319
      %v660 = vpop.permute.xlu0 %659
      %663 = vset.pattern.permute.xlu0 0
      %664 = vperm.xlu0 %663, %v320
      %v665 = vpop.permute.xlu0 %664
      %668 = vset.pattern.permute.xlu0 0
      %669 = vperm.xlu0 %668, %v321
      %v670 = vpop.permute.xlu0 %669
      %673 = vset.pattern.permute.xlu0 0
      %674 = vperm.xlu0 %673, %v322
      %v675 = vpop.permute.xlu0 %674
      %678 = vset.pattern.permute.xlu0 0
      %679 = vperm.xlu0 %678, %v323
      %v680 = vpop.permute.xlu0 %679
      %683 = vset.pattern.permute.xlu0 0
      %684 = vperm.xlu0 %683, %v324
      %v685 = vpop.permute.xlu0 %684
      %688 = vset.pattern.permute.xlu0 0
      %689 = vperm.xlu0 %688, %v325
      %v690 = vpop.permute.xlu0 %689
      %693 = vset.pattern.permute.xlu0 0
      %694 = vperm.xlu0 %693, %v326
      %v695 = vpop.permute.xlu0 %694
      %698 = vset.pattern.permute.xlu0 0
      %699 = vperm.xlu0 %698, %v327
      %v700 = vpop.permute.xlu0 %699
      %703 = vset.pattern.permute.xlu0 0
      %704 = vperm.xlu0 %703, %v328
      %v705 = vpop.permute.xlu0 %704
      %708 = vset.pattern.permute.xlu0 0
      %709 = vperm.xlu0 %708, %v329
      %v710 = vpop.permute.xlu0 %709
      %713 = vset.pattern.permute.xlu0 0
      %714 = vperm.xlu0 %713, %v330
      %v715 = vpop.permute.xlu0 %714
      %718 = vset.pattern.permute.xlu0 0
      %719 = vperm.xlu0 %718, %v331
      %v720 = vpop.permute.xlu0 %719
      %723 = vset.pattern.permute.xlu0 0
      %724 = vperm.xlu0 %723, %v332
      %v725 = vpop.permute.xlu0 %724
      %728 = vset.pattern.permute.xlu0 0
      %729 = vperm.xlu0 %728, %v333
      %v730 = vpop.permute.xlu0 %729
      %733 = vset.pattern.permute.xlu0 0
      %734 = vperm.xlu0 %733, %v334
      %v735 = vpop.permute.xlu0 %734
      %738 = vset.pattern.permute.xlu0 0
      %739 = vperm.xlu0 %738, %v335
      %v740 = vpop.permute.xlu0 %739
      %743 = vset.pattern.permute.xlu0 0
      %744 = vperm.xlu0 %743, %v336
      %v745 = vpop.permute.xlu0 %744
      %748 = vset.pattern.permute.xlu0 0
      %749 = vperm.xlu0 %748, %v337
      %v750 = vpop.permute.xlu0 %749
      %753 = vset.pattern.permute.xlu0 0
      %754 = vperm.xlu0 %753, %v338
      %v755 = vpop.permute.xlu0 %754
      %758 = vset.pattern.permute.xlu0 0
      %759 = vperm.xlu0 %758, %v339
      %v760 = vpop.permute.xlu0 %759
      %763 = vset.pattern.permute.xlu0 0
      %764 = vperm.xlu0 %763, %v340
      %v765 = vpop.permute.xlu0 %764
      %768 = vset.pattern.permute.xlu0 0
      %769 = vperm.xlu0 %768, %v341
      %v770 = vpop.permute.xlu0 %769
      %773 = vset.pattern.permute.xlu0 0
      %774 = vperm.xlu0 %773, %v342
      %v775 = vpop.permute.xlu0 %774
      %778 = vset.pattern.permute.xlu0 0
      %779 = vperm.xlu0 %778, %v343
      %v780 = vpop.permute.xlu0 %779
      %v783 = vlaneseq
      %v784 = vshrl.u32 %v783, 7
      %v785 = vsub.s32 0, %v784
      %v786 = vrot.slane %v345, %v785
      %vm788 = vcmp.ge.f32.partialorder %v545, %v786
      %vm789 = vcmp.ge.f32.partialorder %v550, %v786
      %vm790 = vcmp.ge.f32.partialorder %v555, %v786
      %vm791 = vcmp.ge.f32.partialorder %v560, %v786
      %vm792 = vcmp.ge.f32.partialorder %v565, %v786
      %vm793 = vcmp.ge.f32.partialorder %v570, %v786
      %vm794 = vcmp.ge.f32.partialorder %v575, %v786
      %vm795 = vcmp.ge.f32.partialorder %v580, %v786
      %vm796 = vcmp.ge.f32.partialorder %v585, %v786
      %vm797 = vcmp.ge.f32.partialorder %v590, %v786
      %vm798 = vcmp.ge.f32.partialorder %v595, %v786
      %vm799 = vcmp.ge.f32.partialorder %v600, %v786
      %vm800 = vcmp.ge.f32.partialorder %v605, %v786
      %vm801 = vcmp.ge.f32.partialorder %v610, %v786
      %vm802 = vcmp.ge.f32.partialorder %v615, %v786
      %vm803 = vcmp.ge.f32.partialorder %v620, %v786
      %vm804 = vcmp.ge.f32.partialorder %v625, %v786
      %vm805 = vcmp.ge.f32.partialorder %v630, %v786
      %vm806 = vcmp.ge.f32.partialorder %v635, %v786
      %vm807 = vcmp.ge.f32.partialorder %v640, %v786
      %vm808 = vcmp.ge.f32.partialorder %v645, %v786
      %vm809 = vcmp.ge.f32.partialorder %v650, %v786
      %vm810 = vcmp.ge.f32.partialorder %v655, %v786
      %vm811 = vcmp.ge.f32.partialorder %v660, %v786
      %vm812 = vcmp.ge.f32.partialorder %v665, %v786
      %vm813 = vcmp.ge.f32.partialorder %v670, %v786
      %vm814 = vcmp.ge.f32.partialorder %v675, %v786
      %vm815 = vcmp.ge.f32.partialorder %v680, %v786
      %vm816 = vcmp.ge.f32.partialorder %v685, %v786
      %vm817 = vcmp.ge.f32.partialorder %v690, %v786
      %vm818 = vcmp.ge.f32.partialorder %v695, %v786
      %vm819 = vcmp.ge.f32.partialorder %v700, %v786
      %vm820 = vcmp.ge.f32.partialorder %v705, %v786
      %vm821 = vcmp.ge.f32.partialorder %v710, %v786
      %vm822 = vcmp.ge.f32.partialorder %v715, %v786
      %vm823 = vcmp.ge.f32.partialorder %v720, %v786
      %vm824 = vcmp.ge.f32.partialorder %v725, %v786
      %vm825 = vcmp.ge.f32.partialorder %v730, %v786
      %vm826 = vcmp.ge.f32.partialorder %v735, %v786
      %vm827 = vcmp.ge.f32.partialorder %v740, %v786
      %vm828 = vcmp.ge.f32.partialorder %v745, %v786
      %vm829 = vcmp.ge.f32.partialorder %v750, %v786
      %vm830 = vcmp.ge.f32.partialorder %v755, %v786
      %vm831 = vcmp.ge.f32.partialorder %v760, %v786
      %vm832 = vcmp.ge.f32.partialorder %v765, %v786
      %vm833 = vcmp.ge.f32.partialorder %v770, %v786
      %vm834 = vcmp.ge.f32.partialorder %v775, %v786
      %vm835 = vcmp.ge.f32.partialorder %v780, %v786
      %vm836 = vmand %vm494, %vm788
      %vm837 = vmand %vm495, %vm789
      %vm838 = vmand %vm496, %vm790
      %vm839 = vmand %vm497, %vm791
      %vm840 = vmand %vm498, %vm792
      %vm841 = vmand %vm499, %vm793
      %vm842 = vmand %vm500, %vm794
      %vm843 = vmand %vm501, %vm795
      %vm844 = vmand %vm502, %vm796
      %vm845 = vmand %vm503, %vm797
      %vm846 = vmand %vm504, %vm798
      %vm847 = vmand %vm505, %vm799
      %vm848 = vmand %vm506, %vm800
      %vm849 = vmand %vm507, %vm801
      %vm850 = vmand %vm508, %vm802
      %vm851 = vmand %vm509, %vm803
      %vm852 = vmand %vm510, %vm804
      %vm853 = vmand %vm511, %vm805
      %vm854 = vmand %vm512, %vm806
      %vm855 = vmand %vm513, %vm807
      %vm856 = vmand %vm514, %vm808
      %vm857 = vmand %vm515, %vm809
      %vm858 = vmand %vm516, %vm810
      %vm859 = vmand %vm517, %vm811
      %vm860 = vmand %vm518, %vm812
      %vm861 = vmand %vm519, %vm813
      %vm862 = vmand %vm520, %vm814
      %vm863 = vmand %vm521, %vm815
      %vm864 = vmand %vm522, %vm816
      %vm865 = vmand %vm523, %vm817
      %vm866 = vmand %vm524, %vm818
      %vm867 = vmand %vm525, %vm819
      %vm868 = vmand %vm526, %vm820
      %vm869 = vmand %vm527, %vm821
      %vm870 = vmand %vm528, %vm822
      %vm871 = vmand %vm529, %vm823
      %vm872 = vmand %vm530, %vm824
      %vm873 = vmand %vm531, %vm825
      %vm874 = vmand %vm532, %vm826
      %vm875 = vmand %vm533, %vm827
      %vm876 = vmand %vm534, %vm828
      %vm877 = vmand %vm535, %vm829
      %vm878 = vmand %vm536, %vm830
      %vm879 = vmand %vm537, %vm831
      %vm880 = vmand %vm538, %vm832
      %vm881 = vmand %vm539, %vm833
      %vm882 = vmand %vm540, %vm834
      %vm883 = vmand %vm541, %vm835
      %v884 = vsub.f32 %v545, %v786
      %v885 = vsub.f32 %v550, %v786
      %v886 = vsub.f32 %v555, %v786
      %v887 = vsub.f32 %v560, %v786
      %v888 = vsub.f32 %v565, %v786
      %v889 = vsub.f32 %v570, %v786
      %v890 = vsub.f32 %v575, %v786
      %v891 = vsub.f32 %v580, %v786
      %v892 = vsub.f32 %v585, %v786
      %v893 = vsub.f32 %v590, %v786
      %v894 = vsub.f32 %v595, %v786
      %v895 = vsub.f32 %v600, %v786
      %v896 = vsub.f32 %v605, %v786
      %v897 = vsub.f32 %v610, %v786
      %v898 = vsub.f32 %v615, %v786
      %v899 = vsub.f32 %v620, %v786
      %v900 = vsub.f32 %v625, %v786
      %v901 = vsub.f32 %v630, %v786
      %v902 = vsub.f32 %v635, %v786
      %v903 = vsub.f32 %v640, %v786
      %v904 = vsub.f32 %v645, %v786
      %v905 = vsub.f32 %v650, %v786
      %v906 = vsub.f32 %v655, %v786
      %v907 = vsub.f32 %v660, %v786
      %v908 = vsub.f32 %v665, %v786
      %v909 = vsub.f32 %v670, %v786
      %v910 = vsub.f32 %v675, %v786
      %v911 = vsub.f32 %v680, %v786
      %v912 = vsub.f32 %v685, %v786
      %v913 = vsub.f32 %v690, %v786
      %v914 = vsub.f32 %v695, %v786
      %v915 = vsub.f32 %v700, %v786
      %v916 = vsub.f32 %v705, %v786
      %v917 = vsub.f32 %v710, %v786
      %v918 = vsub.f32 %v715, %v786
      %v919 = vsub.f32 %v720, %v786
      %v920 = vsub.f32 %v725, %v786
      %v921 = vsub.f32 %v730, %v786
      %v922 = vsub.f32 %v735, %v786
      %v923 = vsub.f32 %v740, %v786
      %v924 = vsub.f32 %v745, %v786
      %v925 = vsub.f32 %v750, %v786
      %v926 = vsub.f32 %v755, %v786
      %v927 = vsub.f32 %v760, %v786
      %v928 = vsub.f32 %v765, %v786
      %v929 = vsub.f32 %v770, %v786
      %v930 = vsub.f32 %v775, %v786
      %v931 = vsub.f32 %v780, %v786
      %v932 = vsel %vm836, %v884, 0.0
      %v933 = vsel %vm837, %v885, 0.0
      %v934 = vsel %vm838, %v886, 0.0
      %v935 = vsel %vm839, %v887, 0.0
      %v936 = vsel %vm840, %v888, 0.0
      %v937 = vsel %vm841, %v889, 0.0
      %v938 = vsel %vm842, %v890, 0.0
      %v939 = vsel %vm843, %v891, 0.0
      %v940 = vsel %vm844, %v892, 0.0
      %v941 = vsel %vm845, %v893, 0.0
      %v942 = vsel %vm846, %v894, 0.0
      %v943 = vsel %vm847, %v895, 0.0
      %v944 = vsel %vm848, %v896, 0.0
      %v945 = vsel %vm849, %v897, 0.0
      %v946 = vsel %vm850, %v898, 0.0
      %v947 = vsel %vm851, %v899, 0.0
      %v948 = vsel %vm852, %v900, 0.0
      %v949 = vsel %vm853, %v901, 0.0
      %v950 = vsel %vm854, %v902, 0.0
      %v951 = vsel %vm855, %v903, 0.0
      %v952 = vsel %vm856, %v904, 0.0
      %v953 = vsel %vm857, %v905, 0.0
      %v954 = vsel %vm858, %v906, 0.0
      %v955 = vsel %vm859, %v907, 0.0
      %v956 = vsel %vm860, %v908, 0.0
      %v957 = vsel %vm861, %v909, 0.0
      %v958 = vsel %vm862, %v910, 0.0
      %v959 = vsel %vm863, %v911, 0.0
      %v960 = vsel %vm864, %v912, 0.0
      %v961 = vsel %vm865, %v913, 0.0
      %v962 = vsel %vm866, %v914, 0.0
      %v963 = vsel %vm867, %v915, 0.0
      %v964 = vsel %vm868, %v916, 0.0
      %v965 = vsel %vm869, %v917, 0.0
      %v966 = vsel %vm870, %v918, 0.0
      %v967 = vsel %vm871, %v919, 0.0
      %v968 = vsel %vm872, %v920, 0.0
      %v969 = vsel %vm873, %v921, 0.0
      %v970 = vsel %vm874, %v922, 0.0
      %v971 = vsel %vm875, %v923, 0.0
      %v972 = vsel %vm876, %v924, 0.0
      %v973 = vsel %vm877, %v925, 0.0
      %v974 = vsel %vm878, %v926, 0.0
      %v975 = vsel %vm879, %v927, 0.0
      %v976 = vsel %vm880, %v928, 0.0
      %v977 = vsel %vm881, %v929, 0.0
      %v978 = vsel %vm882, %v930, 0.0
      %v979 = vsel %vm883, %v931, 0.0
      %v980 = vadd.f32 %v932, %v933
      %v981 = vadd.f32 %v980, %v934
      %v982 = vadd.f32 %v981, %v935
      %v983 = vadd.f32 %v982, %v936
      %v984 = vadd.f32 %v983, %v937
      %v985 = vadd.f32 %v984, %v938
      %v986 = vadd.f32 %v985, %v939
      %v987 = vadd.f32 %v986, %v940
      %v988 = vadd.f32 %v987, %v941
      %v989 = vadd.f32 %v988, %v942
      %v990 = vadd.f32 %v989, %v943
      %v991 = vadd.f32 %v990, %v944
      %v992 = vadd.f32 %v991, %v945
      %v993 = vadd.f32 %v992, %v946
      %v994 = vadd.f32 %v993, %v947
      %v995 = vadd.f32 %v994, %v948
      %v996 = vadd.f32 %v995, %v949
      %v997 = vadd.f32 %v996, %v950
      %v998 = vadd.f32 %v997, %v951
      %v999 = vadd.f32 %v998, %v952
      %v1000 = vadd.f32 %v999, %v953
      %v1001 = vadd.f32 %v1000, %v954
      %v1002 = vadd.f32 %v1001, %v955
      %v1003 = vadd.f32 %v1002, %v956
      %v1004 = vadd.f32 %v1003, %v957
      %v1005 = vadd.f32 %v1004, %v958
      %v1006 = vadd.f32 %v1005, %v959
      %v1007 = vadd.f32 %v1006, %v960
      %v1008 = vadd.f32 %v1007, %v961
      %v1009 = vadd.f32 %v1008, %v962
      %v1010 = vadd.f32 %v1009, %v963
      %v1011 = vadd.f32 %v1010, %v964
      %v1012 = vadd.f32 %v1011, %v965
      %v1013 = vadd.f32 %v1012, %v966
      %v1014 = vadd.f32 %v1013, %v967
      %v1015 = vadd.f32 %v1014, %v968
      %v1016 = vadd.f32 %v1015, %v969
      %v1017 = vadd.f32 %v1016, %v970
      %v1018 = vadd.f32 %v1017, %v971
      %v1019 = vadd.f32 %v1018, %v972
      %v1020 = vadd.f32 %v1019, %v973
      %v1021 = vadd.f32 %v1020, %v974
      %v1022 = vadd.f32 %v1021, %v975
      %v1023 = vadd.f32 %v1022, %v976
      %v1024 = vadd.f32 %v1023, %v977
      %v1025 = vadd.f32 %v1024, %v978
      %v1026 = vadd.f32 %v1025, %v979
      %v1027 = vrot.slane %v1026, 4
      %v1028 = vadd.f32 %v1026, %v1027
      %v1029 = vrot.slane %v1028, 2
      %v1030 = vadd.f32 %v1028, %v1029
      %v1031 = vrot.slane %v1030, 1
      %v1032 = vadd.f32 %v1030, %v1031
      %vm1033 = vcmp.lt.f32.partialorder %v1032, 1.0
      %v1034 = vsel %vm1033, 1.0, 0.0
      %v1035 = vlaneseq
      %v1036 = vshrl.u32 %v1035, 7
      %v1037 = vadd.s32 %v1036, 8
      %vm1038 = vcmp.eq.s32.totalorder %v1036, %v493
      %vm1039 = vcmp.eq.s32.totalorder %v1037, %v493
      %v1040 = vsel %vm1038, %v1034, 0.0
      %v1041 = vsel %vm1039, %v1034, 0.0
      %1042 = vadd.xlane.f32.xlu0 %v1040
      %v1043 = vpop.xlane.xlu0 %1042
      %1044 = vadd.xlane.f32.xlu0 %v1041
      %v1045 = vpop.xlane.xlu0 %1044
      %vm1046 = vcmask 7168
      %1047 = vst.msk [vmem:[%s240] sm:$0xff] %vm1046, %v1043
      %1048 = vst.msk [vmem:[%s240 + $0x8] sm:$0xff] %vm1046, %v1045
      %v1049 = vmul.f32 %v1034, %v345
      %v1050 = vlaneseq
      %v1051 = vshrl.u32 %v1050, 7
      %v1052 = vsub.s32 0, %v1051
      %v1053 = vrot.slane %v1049, %v1052
      %v1054 = vsel %vm1038, %v1053, 0.0
      %v1055 = vsel %vm1039, %v1053, 0.0
      %1056 = vadd.xlane.f32.xlu0 %v1054
      %v1057 = vpop.xlane.xlu0 %1056
      %1058 = vadd.xlane.f32.xlu0 %v1055
      %v1059 = vpop.xlane.xlu0 %1058
      %1060 = vst.msk [vmem:[%s246] sm:$0xff] %vm1046, %v1057
      %1061 = vst.msk [vmem:[%s246 + $0x8] sm:$0xff] %vm1046, %v1059
      %s1062 = smul.u32 2, %s17
      %p1063 = scmp.lt.s32.totalorder %s1062, 5
      %s1064 = scalar_select %p1063, %s1062, 5
      %s1065 = smul.addr %s1064, 8
      %s1066 = scalar_lea.vmem %s4, %s1065
      %s1067 = smul.u32 2, %s17
      %p1068 = scmp.lt.s32.totalorder %s1067, 5
      %s1069 = scalar_select %p1068, %s1067, 5
      %s1070 = smul.addr %s1069, 8
      %s1071 = scalar_lea.vmem %s5, %s1070
      // Predicated region
      $region37: #{tpu_custom_call.1} parent=35 // pred_check
        %p1072 = pneg %p129
      $region38: #{tpu_custom_call.1} parent=35 // pred_check_branch
        %1074 = sbr.rel (%p1072) target = $region40
      $region39: #{tpu_custom_call.1} parent=35 // pred_region
        %s1075 = smul.u32 2, %s17
      $region40: #{tpu_custom_call.1} parent=35 // pred_fallthru
        _
      // Predicated region
      $region41: #{tpu_custom_call.1} parent=35 // pred_check
        %p1076 = pneg %p155
      $region42: #{tpu_custom_call.1} parent=35 // pred_check_branch
        %1078 = sbr.rel (%p1076) target = $region44
      $region43: #{tpu_custom_call.1} parent=35 // pred_region
        %s1079 = smul.u32 2, %s17
      $region44: #{tpu_custom_call.1} parent=35 // pred_fallthru
        _
    $region36: #{tpu_custom_call.1} parent=5 // pred_fallthru
      _
    %p1080 = scmp.le.s32.totalorder 2, %s12
    // Predicated region
    $region45: #{tpu_custom_call.1} parent=5 // pred_check
      %p1081 = pneg %p1080
    $region46: #{tpu_custom_call.1} parent=5 // pred_check_branch
      %1083 = sbr.rel (%p1081) target = $region48
    $region47: #{tpu_custom_call.1} parent=5 // pred_region
      %s1084 = ssub.s32 %s12, 2
      // Predicated region
      $region49: #{tpu_custom_call.1} parent=47 // pred_check
        %p1085 = pneg %p135
      $region50: #{tpu_custom_call.1} parent=47 // pred_check_branch
        %1087 = sbr.rel (%p1085) target = $region52
      $region51: #{tpu_custom_call.1} parent=47 // pred_region
        %s1088 = smul.u32 2, %s18
        %p1089 = scmp.lt.s32.totalorder %s1088, 5
        %s1090 = scalar_select %p1089, %s1088, 5
        %s1091 = smul.addr %s1090, 8
        %s1092 = scalar_lea.vmem %s4, %s1091
      $region52: #{tpu_custom_call.1} parent=47 // pred_fallthru
        _
      // Predicated region
      $region53: #{tpu_custom_call.1} parent=47 // pred_check
        %p1093 = pneg %p161
      $region54: #{tpu_custom_call.1} parent=47 // pred_check_branch
        %1095 = sbr.rel (%p1093) target = $region56
      $region55: #{tpu_custom_call.1} parent=47 // pred_region
        %s1096 = smul.u32 2, %s18
        %p1097 = scmp.lt.s32.totalorder %s1096, 5
        %s1098 = scalar_select %p1097, %s1096, 5
        %s1099 = smul.addr %s1098, 8
        %s1100 = scalar_lea.vmem %s5, %s1099
      $region56: #{tpu_custom_call.1} parent=47 // pred_fallthru
        _
    $region48: #{tpu_custom_call.1} parent=5 // pred_fallthru
      _
  $region6: #{tpu_custom_call.1} parent=0 // loop_footer
    %s16 = sadd.s32 1, %s12
  $region7: #{tpu_custom_call.1} parent=0 // loop_footer_branch
    %11 = sbr.rel target = $region3
  $region8: #{tpu_custom_call.1} parent=0 // loop_exit
    _

</llo_original>
